<compile_context>
chip_gen: v5e
topology: v5e:2x2
jax: 0.10.0
libtpu: 0.0.40
codegen_flags: <defaults>
</compile_context>

<pallas_src>
import jax
import jax.numpy as jnp
from jax.experimental import pallas as pl
from jax.experimental.pallas import tpu as pltpu


def pnet_kernel(x_ref, w1_ref, b1_ref, w2_ref, b2_ref, o_ref):
    # Fused 2-layer MLP: relu(x @ W1 + b1) @ W2 + b2, f32 accumulation.
    w1 = w1_ref[...]
    # Cast x to the weight dtype so a bf16-weight model uses bf16 MXU passes
    # for BOTH matmuls (no silent f32 promotion); accumulate in f32.
    x = x_ref[...].astype(w1.dtype)
    h = jnp.dot(x, w1, preferred_element_type=jnp.float32)
    h = jnp.maximum(h + b1_ref[...].astype(jnp.float32), 0.0)
    w2 = w2_ref[...]
    out = jnp.dot(h.astype(w2.dtype), w2, preferred_element_type=jnp.float32)
    out = out + b2_ref[...].astype(jnp.float32)
    o_ref[...] = out.astype(o_ref.dtype)


def _pad_to(n, m):
    return ((n + m - 1) // m) * m


def _cdiv(a, b):
    return -(-a // b)


def pnet_forward(x, w1, b1, w2, b2, *, tb=1024):
    """Fused PNet MLP forward.

    x:  [B, input_dim]
    w1: [input_dim, hidden]   (hidden = input_dim + num_params)
    b1: [hidden] or [1, hidden]
    w2: [hidden, num_params]
    b2: [num_params] or [1, num_params]
    Returns [B, num_params] in x.dtype.

    Recommended (memory-bound) path: pass x and all weights/biases as bf16;
    accumulation, bias add and ReLU stay f32 inside the kernel.
    """
    B, input_dim = x.shape
    hidden = w1.shape[1]
    num_params = w2.shape[1]
    b1 = b1.reshape(1, hidden)
    b2 = b2.reshape(1, num_params)

    # ---- Batch tile selection -------------------------------------------
    # Big tiles amortize per-grid-step overhead (v5e/v6e); but if one tile
    # would cover the whole (large) batch, split it so v7x's two TensorCores
    # both get a "parallel" grid step.  tb is always a multiple of 8; the
    # ragged last tile (B % tb != 0) is handled by Pallas boundary blocks —
    # no padded x copy, no output slice.
    tb = max(8, (min(tb, 2048) // 8) * 8)
    b_ceil = _pad_to(B, 8)
    if b_ceil <= tb:
        tb = _pad_to(_cdiv(b_ceil, 2), 8) if B >= 512 else b_ceil
    grid_b = _cdiv(B, tb)

    # ---- Cost estimate (lets XLA schedule neighbors around the call) -----
    flops = 2 * B * (input_dim * hidden + hidden * num_params)
    bytes_accessed = (
        x.size * x.dtype.itemsize
        + w1.size * w1.dtype.itemsize + b1.size * b1.dtype.itemsize
        + w2.size * w2.dtype.itemsize + b2.size * b2.dtype.itemsize
        + B * num_params * x.dtype.itemsize)

    # ---- VMEM sizing ------------------------------------------------------
    # Double-buffered x/out tiles + (double-buffered, constant-index) weights
    # + f32 hidden intermediate.  Only raise the scoped limit if the default
    # (32 MiB) would be exceeded — matters if dims ever scale up; cap at the
    # v7x physical budget (64 MiB).
    wbytes = (w1.size * w1.dtype.itemsize + b1.size * b1.dtype.itemsize
              + w2.size * w2.dtype.itemsize + b2.size * b2.dtype.itemsize)
    vmem_need = (2 * (tb * input_dim + tb * num_params) * x.dtype.itemsize
                 + 2 * wbytes + 2 * tb * hidden * 4)
    vmem_limit = None
    if vmem_need > (32 << 20):
        vmem_limit = min(int(vmem_need * 5 // 4), 64 << 20)

    out = pl.pallas_call(
        pnet_kernel,
        out_shape=jax.ShapeDtypeStruct((B, num_params), x.dtype),
        grid=(grid_b,),
        in_specs=[
            pl.BlockSpec((tb, input_dim), lambda i: (i, 0)),       # x tile
            pl.BlockSpec((input_dim, hidden), lambda i: (0, 0)),   # W1 (resident)
            pl.BlockSpec((1, hidden), lambda i: (0, 0)),           # b1
            pl.BlockSpec((hidden, num_params), lambda i: (0, 0)),  # W2 (resident)
            pl.BlockSpec((1, num_params), lambda i: (0, 0)),       # b2
        ],
        out_specs=pl.BlockSpec((tb, num_params), lambda i: (i, 0)),
        compiler_params=pltpu.CompilerParams(
            dimension_semantics=("parallel",),
            vmem_limit_bytes=vmem_limit),
        cost_estimate=pl.CostEstimate(
            flops=flops, transcendentals=0, bytes_accessed=bytes_accessed),
    )(x, w1, b1, w2, b2)
    return out


def init_pnet_params(key, input_dim, num_params, dtype=jnp.float32):
    """Deterministic init mimicking PyTorch Linear default (U[-1/sqrt(fan_in), +])."""
    hidden = input_dim + num_params
    k1, k2, k3, k4 = jax.random.split(key, 4)
    bound1 = 1.0 / jnp.sqrt(input_dim)
    bound2 = 1.0 / jnp.sqrt(hidden)
    w1 = jax.random.uniform(k1, (input_dim, hidden), dtype, -bound1, bound1)
    b1 = jax.random.uniform(k2, (hidden,), dtype, -bound1, bound1)
    w2 = jax.random.uniform(k3, (hidden, num_params), dtype, -bound2, bound2)
    b2 = jax.random.uniform(k4, (num_params,), dtype, -bound2, bound2)
    return w1, b1, w2, b2


def _ref_mlp(x, w1, b1, w2, b2):
    return jnp.maximum(x @ w1 + b1.reshape(1, -1), 0.0) @ w2 + b2.reshape(1, -1)


if __name__ == "__main__":
    key = jax.random.PRNGKey(0)

    # --- Test 1: small shapes consistent with PNet(input_dim=32, num_params=16)
    B, input_dim, num_params = 16, 32, 16
    kx, kp, key = jax.random.split(key, 3)
    x = jax.random.normal(kx, (B, input_dim), dtype=jnp.float32)
    w1, b1, w2, b2 = init_pnet_params(kp, input_dim, num_params)

    out = jax.block_until_ready(pnet_forward(x, w1, b1, w2, b2))
    ref = _ref_mlp(x, w1, b1, w2, b2)
    assert out.shape == (B, num_params)
    assert jnp.allclose(out, ref, atol=1e-5, rtol=1e-5), "mismatch vs reference (f32, small)"

    # --- Test 2: larger batch not divisible by the tile -> grid of 2 with a
    #             ragged last tile (no wrapper-side padded copy of x).
    B2, in2, np2 = 1000, 96, 64
    kx2, kp2, key = jax.random.split(key, 3)
    x2 = jax.random.normal(kx2, (B2, in2), dtype=jnp.float32)
    w1b, b1b, w2b, b2b = init_pnet_params(kp2, in2, np2)
    out2 = jax.block_until_ready(pnet_forward(x2, w1b, b1b, w2b, b2b))
    ref2 = _ref_mlp(x2, w1b, b1b, w2b, b2b)
    assert out2.shape == (B2, np2)
    assert jnp.allclose(out2, ref2, atol=1e-4, rtol=1e-4), "mismatch vs reference (f32, large)"

    # --- Test 3: bf16 end-to-end (recommended memory-bound path), f32 accumulation.
    out_bf16 = jax.block_until_ready(
        pnet_forward(x.astype(jnp.bfloat16),
                     w1.astype(jnp.bfloat16), b1.astype(jnp.bfloat16),
                     w2.astype(jnp.bfloat16), b2.astype(jnp.bfloat16)))
    assert out_bf16.shape == (B, num_params)
    assert jnp.max(jnp.abs(out_bf16.astype(jnp.float32) - ref)) < 0.1, \
        "bf16 path diverged from f32 reference"

    print("KERNEL_OK")
</pallas_src>

<mosaic_0001>
module attributes {stable_mosaic.version = 11 : i64} {
  func.func @pnet_kernel(%arg0: i32, %arg1: memref<16x32xf32, #tpu.memory_space<vmem>>, %arg2: memref<32x48xf32, #tpu.memory_space<vmem>>, %arg3: memref<1x48xf32, #tpu.memory_space<vmem>>, %arg4: memref<48x16xf32, #tpu.memory_space<vmem>>, %arg5: memref<1x16xf32, #tpu.memory_space<vmem>>, %arg6: memref<16x16xf32, #tpu.memory_space<vmem>>) attributes {dimension_semantics = [#tpu.dimension_semantics<parallel>], iteration_bounds = array<i64: 1>, scalar_prefetch = 0 : i64, scratch_operands = 0 : i64, tpu.core_type = #tpu.core_type<tc>, window_params = [{transform_indices = @transform_0, window_bounds = array<i64: 16, 32>}, {pipeline_mode = #tpu.pipeline_mode<synchronous>, transform_indices = @transform_1, window_bounds = array<i64: 32, 48>}, {pipeline_mode = #tpu.pipeline_mode<synchronous>, transform_indices = @transform_2, window_bounds = array<i64: 1, 48>}, {pipeline_mode = #tpu.pipeline_mode<synchronous>, transform_indices = @transform_3, window_bounds = array<i64: 48, 16>}, {pipeline_mode = #tpu.pipeline_mode<synchronous>, transform_indices = @transform_4, window_bounds = array<i64: 1, 16>}, {transform_indices = @transform_5, window_bounds = array<i64: 16, 16>}]} {
    %c0 = arith.constant 0 : index
    %c0_0 = arith.constant 0 : index
    %0 = vector.load %arg2[%c0, %c0_0] : memref<32x48xf32, #tpu.memory_space<vmem>>, vector<32x48xf32>
    %c0_1 = arith.constant 0 : index
    %c0_2 = arith.constant 0 : index
    %1 = vector.load %arg1[%c0_1, %c0_2] : memref<16x32xf32, #tpu.memory_space<vmem>>, vector<16x32xf32>
    %cst = arith.constant dense<0.000000e+00> : vector<16x48xf32>
    %2 = tpu.matmul %1, %0, %cst {dimension_numbers = #tpu.dot_dimension_numbers<[1], [0], [0], [1], [0, 0, 1, 1], [], []>} : vector<16x32xf32>, vector<32x48xf32>, vector<16x48xf32> -> vector<16x48xf32>
    %c0_3 = arith.constant 0 : index
    %c0_4 = arith.constant 0 : index
    %3 = vector.load %arg3[%c0_3, %c0_4] : memref<1x48xf32, #tpu.memory_space<vmem>>, vector<1x48xf32>
    %4 = vector.broadcast %3 : vector<1x48xf32> to vector<16x48xf32>
    %5 = arith.addf %2, %4 : vector<16x48xf32>
    %cst_5 = arith.constant 0.000000e+00 : f32
    %6 = vector.broadcast %cst_5 : f32 to vector<16x48xf32>
    %7 = arith.maximumf %5, %6 : vector<16x48xf32>
    %c0_6 = arith.constant 0 : index
    %c0_7 = arith.constant 0 : index
    %8 = vector.load %arg4[%c0_6, %c0_7] : memref<48x16xf32, #tpu.memory_space<vmem>>, vector<48x16xf32>
    %cst_8 = arith.constant dense<0.000000e+00> : vector<16x16xf32>
    %9 = tpu.matmul %7, %8, %cst_8 {dimension_numbers = #tpu.dot_dimension_numbers<[1], [0], [0], [1], [0, 0, 1, 1], [], []>} : vector<16x48xf32>, vector<48x16xf32>, vector<16x16xf32> -> vector<16x16xf32>
    %c0_9 = arith.constant 0 : index
    %c0_10 = arith.constant 0 : index
    %10 = vector.load %arg5[%c0_9, %c0_10] : memref<1x16xf32, #tpu.memory_space<vmem>>, vector<1x16xf32>
    %11 = vector.broadcast %10 : vector<1x16xf32> to vector<16x16xf32>
    %12 = arith.addf %9, %11 : vector<16x16xf32>
    %c0_11 = arith.constant 0 : index
    %c0_12 = arith.constant 0 : index
    %13 = vector.load %arg6[%c0_11, %c0_12] : memref<16x16xf32, #tpu.memory_space<vmem>>, vector<16x16xf32>
    tpu.vector_store %arg6[%c0_11, %c0_12], %12 {strides = array<i32>} : memref<16x16xf32, #tpu.memory_space<vmem>>, vector<16x16xf32>,
    return
  }
  func.func @transform_0(%arg0: i32) -> (i32, i32) {
    %c0_i32 = arith.constant 0 : i32
    %c0_i32_0 = arith.constant 0 : i32
    return %arg0, %c0_i32 : i32, i32
  }
  func.func @transform_1(%arg0: i32) -> (i32, i32) {
    %c0_i32 = arith.constant 0 : i32
    %c0_i32_0 = arith.constant 0 : i32
    %c0_i32_1 = arith.constant 0 : i32
    return %c0_i32, %c0_i32_0 : i32, i32
  }
  func.func @transform_2(%arg0: i32) -> (i32, i32) {
    %c0_i32 = arith.constant 0 : i32
    %c0_i32_0 = arith.constant 0 : i32
    %c0_i32_1 = arith.constant 0 : i32
    return %c0_i32, %c0_i32_0 : i32, i32
  }
  func.func @transform_3(%arg0: i32) -> (i32, i32) {
    %c0_i32 = arith.constant 0 : i32
    %c0_i32_0 = arith.constant 0 : i32
    %c0_i32_1 = arith.constant 0 : i32
    return %c0_i32, %c0_i32_0 : i32, i32
  }
  func.func @transform_4(%arg0: i32) -> (i32, i32) {
    %c0_i32 = arith.constant 0 : i32
    %c0_i32_0 = arith.constant 0 : i32
    %c0_i32_1 = arith.constant 0 : i32
    return %c0_i32, %c0_i32_0 : i32, i32
  }
  func.func @transform_5(%arg0: i32) -> (i32, i32) {
    %c0_i32 = arith.constant 0 : i32
    %c0_i32_0 = arith.constant 0 : i32
    return %arg0, %c0_i32 : i32, i32
  }
}

</mosaic_0001>

<llo_original>
// kernel: tpu_custom_call.1
$region0: #{tpu_custom_call.1}
  #allocation0 [shape = 'u32[]', space=smem, size = 0x4, offset = 0x4, fixed_abs, tag = 'smem constant byte address 0x4 - core index']
  #allocation1 [shape = 'u32[72,128]{1,0:T(1,128)}', space=vmem, size = 0x9000, scoped, tag = 'internal scratch']
  %s0 = inlined_call_operand.vmem [shape: f32[16,32], index: 0, kind: input, shape index: {}]
  %s1 = inlined_call_operand.vmem [shape: f32[32,48], index: 1, kind: input, shape index: {}]
  %s2 = inlined_call_operand.vmem [shape: f32[1,48], index: 2, kind: input, shape index: {}]
  %s3 = inlined_call_operand.vmem [shape: f32[48,16], index: 3, kind: input, shape index: {}]
  %s4 = inlined_call_operand.vmem [shape: f32[1,16], index: 4, kind: input, shape index: {}]
  %s5 = inlined_call_operand.hbm [shape: f32[16,16], index: 5, kind: output, shape index: {}]
  %s6 = sld [smem:[#allocation0]]
  $region30: #{tpu_custom_call.1} parent=0
    _
  %s8 = ssub.s32 1, %s6
  %s9 = scalar_select 0, %s8, %s6
  $region1: #{tpu_custom_call.1} parent=0
    #allocation2 [shape = 'u8[8192]{0}', space=vmem, size = 0x2000, scoped, tag = 'output window, operand 0, single buffered']
    #allocation3 [shape = 's32[1]{0}', space=sflag, size = 0x4, scoped, tag = 'scoped memory for tpu_custom_call.1']
    %10 = vsyncpa [#allocation3], 0
    // Predicated region
    $region2: #{tpu_custom_call.1} parent=1 // pred_check
      _
    $region3: #{tpu_custom_call.1} parent=1 // pred_check_branch
      %12 = sbr.rel (0) target = $region5
    $region4: #{tpu_custom_call.1} parent=1 // pred_region
      _
    $region5: #{tpu_custom_call.1} parent=1 // pred_fallthru
      _
    // Predicated region
    $region6: #{tpu_custom_call.1} parent=1 // pred_check
      _
    $region7: #{tpu_custom_call.1} parent=1 // pred_check_branch
      %14 = sbr.rel (0) target = $region9
    $region8: #{tpu_custom_call.1} parent=1 // pred_region
      _
    $region9: #{tpu_custom_call.1} parent=1 // pred_fallthru
      _
    // Predicated region
    $region10: #{tpu_custom_call.1} parent=1 // pred_check
      _
    $region11: #{tpu_custom_call.1} parent=1 // pred_check_branch
      %16 = sbr.rel (0) target = $region13
    $region12: #{tpu_custom_call.1} parent=1 // pred_region
      _
    $region13: #{tpu_custom_call.1} parent=1 // pred_fallthru
      _
    // Predicated region
    $region14: #{tpu_custom_call.1} parent=1 // pred_check
      _
    $region15: #{tpu_custom_call.1} parent=1 // pred_check_branch
      %18 = sbr.rel (0) target = $region17
    $region16: #{tpu_custom_call.1} parent=1 // pred_region
      _
    $region17: #{tpu_custom_call.1} parent=1 // pred_fallthru
      _
    // Predicated region
    $region18: #{tpu_custom_call.1} parent=1 // pred_check
      _
    $region19: #{tpu_custom_call.1} parent=1 // pred_check_branch
      %20 = sbr.rel (0) target = $region21
    $region20: #{tpu_custom_call.1} parent=1 // pred_region
      _
    $region21: #{tpu_custom_call.1} parent=1 // pred_fallthru
      _
    %v21 = vld [vmem:[%s1] sm:$0xff]
    %v22 = vld [vmem:[%s1 + $0x8] sm:$0xff]
    %v23 = vld [vmem:[%s1 + $0x10] sm:$0xff]
    %v24 = vld [vmem:[%s1 + $0x18] sm:$0xff]
    %v25 = vld [vmem:[%s0] sm:$0xff]
    %v26 = vld [vmem:[%s0 + $0x8] sm:$0xff]
    %v27 = vld [vmem:[%s2] sm:$0x1]
    %v29 = vperm.slane %v27, 0
    %vm31 = vcmask 261120
    %v33 = vsel %vm31, %v25, 0
    %v36 = vsel %vm31, %v26, 0
    %38 = vmatpush.msra.mxu0 0.0
    %39 = vmatpush.msra.mxu0 0.0
    %40 = vmatpush.msra.mxu0 0.0
    %41 = vmatpush.msra.mxu0 0.0
    %42 = vmatpush.msra.mxu0 0.0
    %43 = vmatpush.msra.mxu0 0.0
    %44 = vmatpush.msra.mxu0 0.0
    %45 = vmatpush.msra.mxu0 0.0
    %46 = vmatpush.msra.mxu0 0.0
    %47 = vmatpush.msra.mxu0 0.0
    %48 = vmatpush.msra.mxu0 0.0
    %49 = vmatpush.msra.mxu0 0.0
    %50 = vmatpush.msra.mxu0 %v24
    %51 = vmatpush.msra.mxu0 %v23
    %52 = vmatpush.msra.mxu0 %v22
    %53 = vmatpush.msra.mxu0 %v21
    %54 = vmatmul.f32.gmra.mxu0 %v33
    %v55 = vpop.f32.mrf.mxu0
    %v56 = vadd.f32 %v29, %v55
    %57 = vmatmul.f32.gmra.mxu0 %v36
    %v58 = vpop.f32.mrf.mxu0
    %v59 = vadd.f32 %v29, %v58
    %60 = vdwg.mxu0
    %v61 = vmax.f32 %v56, 0.0
    %v62 = vmax.f32 %v59, 0.0
    %v63 = vld [vmem:[%s3] sm:$0xff]
    %v64 = vld [vmem:[%s3 + $0x8] sm:$0xff]
    %v65 = vld [vmem:[%s3 + $0x10] sm:$0xff]
    %v66 = vld [vmem:[%s3 + $0x18] sm:$0xff]
    %v67 = vld [vmem:[%s3 + $0x20] sm:$0xff]
    %v68 = vld [vmem:[%s3 + $0x28] sm:$0xff]
    %v69 = vld [vmem:[%s4] sm:$0x1]
    %v71 = vperm.slane %v69, 0
    %vm73 = vcmask 392192
    %v75 = vsel %vm73, %v61, 0
    %v78 = vsel %vm73, %v62, 0
    %80 = vmatpush.msra.mxu0 0.0
    %81 = vmatpush.msra.mxu0 0.0
    %82 = vmatpush.msra.mxu0 0.0
    %83 = vmatpush.msra.mxu0 0.0
    %84 = vmatpush.msra.mxu0 0.0
    %85 = vmatpush.msra.mxu0 0.0
    %86 = vmatpush.msra.mxu0 0.0
    %87 = vmatpush.msra.mxu0 0.0
    %88 = vmatpush.msra.mxu0 0.0
    %89 = vmatpush.msra.mxu0 0.0
    %90 = vmatpush.msra.mxu0 %v68
    %91 = vmatpush.msra.mxu0 %v67
    %92 = vmatpush.msra.mxu0 %v66
    %93 = vmatpush.msra.mxu0 %v65
    %94 = vmatpush.msra.mxu0 %v64
    %95 = vmatpush.msra.mxu0 %v63
    %96 = vmatmul.f32.gmra.mxu0 %v75
    %v97 = vpop.f32.mrf.mxu0
    %v98 = vadd.f32 %v71, %v97
    %99 = vmatmul.f32.gmra.mxu0 %v78
    %v100 = vpop.f32.mrf.mxu0
    %v101 = vadd.f32 %v71, %v100
    %102 = vdwg.mxu0
    %vm103 = vcmask 130048
    %104 = vst.msk [vmem:[#allocation2] sm:$0xff] %vm103, %v98
    %105 = vst.msk [vmem:[#allocation2 + $0x8] sm:$0xff] %vm103, %v101
    // Predicated region
    $region22: #{tpu_custom_call.1} parent=1 // pred_check
      _
    $region23: #{tpu_custom_call.1} parent=1 // pred_check_branch
      %107 = sbr.rel (0) target = $region25
    $region24: #{tpu_custom_call.1} parent=1 // pred_region
      %109 = vsyncadd [#allocation3], 0
      %s110 = sshll.u32 [#allocation2], 4
      %s111 = int_to_ptr.vmem [resolvable:$true] %s110
      %s112 = sshll.u32 %s5, 4
      %s113 = int_to_ptr.hbm [resolvable:$true] %s112
      %118 = dma.vmem_to_hbm [thread:$0]  %s111, 256, %s113, [#allocation3], 128, 128, 8
    $region25: #{tpu_custom_call.1} parent=1 // pred_fallthru
      _
    // Predicated region
    $region26: #{tpu_custom_call.1} parent=1 // pred_check
      _
    $region27: #{tpu_custom_call.1} parent=1 // pred_check_branch
      %120 = sbr.rel (0) target = $region29
    $region28: #{tpu_custom_call.1} parent=1 // pred_region
      %122 = dma.done [#allocation3], 256
    $region29: #{tpu_custom_call.1} parent=1 // pred_fallthru
      _
    %123 = vsyncpa [#allocation3], 1

</llo_original>
